<compile_context>
chip_gen: v7x
topology: tpu7x:2x2x1
jax: 0.10.0
libtpu: 0.0.40
codegen_flags: <defaults>
</compile_context>

<pallas_src>
import functools

import jax
import jax.numpy as jnp
import numpy as np
from jax.experimental import pallas as pl
from jax.experimental.pallas import tpu as pltpu


def _round_up(x, m):
    return (x + m - 1) // m * m


def decoder_fused_kernel(
    # scalar prefetch
    ids_ref,
    # inputs
    emb_ref, state0_ref, enc_ref, wh_ref, wg_ref, bpg_ref,
    # outputs
    final_ref, attn_out_ref, state_out_ref,
    # scratch
    encproj_ref, state_ref,
    *, seq_len, vocab_size,
):
    H = state0_ref.shape[1]
    S_PAD = enc_ref.shape[0]
    EXTV_PAD = final_ref.shape[1]
    S = seq_len
    V = vocab_size

    step = pl.program_id(0)

    # Once per call: load the initial [h; c; coverage] state and hoist the
    # loop-invariant encoder projection out of the per-step loop.
    @pl.when(step == 0)
    def _init():
        state_ref[...] = state0_ref[...]
        encproj_ref[...] = jnp.dot(enc_ref[...], wh_ref[2 * H:3 * H, :],
                                   preferred_element_type=jnp.float32)

    emb = emb_ref[...]                 # (1, H) embedded token (dropout = identity)
    h_prev = state_ref[0:1, :]         # (1, H)
    c_prev = state_ref[1:2, :]         # (1, H)
    cov = state_ref[2:3, :]            # (1, H)

    # ---------------- additive (coverage) attention ----------------
    # h@W_fch + cov@W_cov merged into a single matmul against the stacked slab rows.
    hc = jnp.concatenate([h_prev, cov], axis=1)                       # (1, 2H)
    x = jnp.tanh(encproj_ref[...]
                 + jnp.dot(hc, wh_ref[0:2 * H, :],
                           preferred_element_type=jnp.float32))        # (S_PAD, H)
    attn_v = wh_ref[3 * H:3 * H + 1, :]                                # (1, H)
    scores = jax.lax.dot_general(attn_v, x, (((1,), (1,)), ((), ())),
                                 preferred_element_type=jnp.float32)   # (1, S_PAD)
    lane_s = jax.lax.broadcasted_iota(jnp.int32, (1, S_PAD), 1)
    scores = jnp.where(lane_s < S, scores, jnp.float32(-1e30))
    m = jnp.max(scores, axis=1, keepdims=True)
    e = jnp.exp(scores - m)
    attn = e / jnp.sum(e, axis=1, keepdims=True)   # exact normalization (review note)

    context = jnp.dot(attn, enc_ref[...], preferred_element_type=jnp.float32)  # (1, H)

    # ---------------- single LSTM step (torch gate order i, f, g, o) --------------
    # concat([emb, context]) @ W_ih + h @ W_hh merged into one matmul on the stacked slab.
    xin = jnp.concatenate([emb, context, h_prev], axis=1)              # (1, 3H)
    gates = (jnp.dot(xin, wg_ref[0:3 * H, :], preferred_element_type=jnp.float32)
             + wg_ref[3 * H:3 * H + 1, :])                             # (1, 4H)
    i_g = jax.nn.sigmoid(gates[:, 0:H])
    f_g = jax.nn.sigmoid(gates[:, H:2 * H])
    g_g = jnp.tanh(gates[:, 2 * H:3 * H])
    o_g = jax.nn.sigmoid(gates[:, 3 * H:4 * H])
    c_new = f_g * c_prev + i_g * g_g
    h_new = o_g * jnp.tanh(c_new)

    # vocab projection (layer1) elided: softmax over a singleton dim => prob_vocab == 1,
    # so its weights never influence the output (dead code in the source).

    # coverage update (the source's attn.view(-1, H) requires S == H)
    cov_new = cov + attn[:, 0:H]

    # ---------------- pointer / generator mixture ----------------
    w_pg = wh_ref[3 * H + 8:3 * H + 12, :]                             # (4, H) rows [ctx,h,emb,cov]
    z = (context * w_pg[0:1] + h_prev * w_pg[1:2]
         + emb * w_pg[2:3] + cov * w_pg[3:4])                          # (1, H)
    p_gen = jax.nn.sigmoid(jnp.sum(z, axis=1, keepdims=True) + bpg_ref[0, 0])   # (1, 1)

    # ---------------- outputs ----------------
    attn_out_ref[...] = attn
    new_state = jnp.concatenate([h_new, c_new, cov_new], axis=0)       # (3, H)
    state_ref[...] = new_state          # carried across grid steps (VMEM scratch)
    state_out_ref[...] = new_state      # constant block index -> flushed to HBM once

    # final_dist in a lane-dense slab, built with disjoint full-width stores (no RMW):
    #   lanes [0, V): p_gen * prob_vocab (== p_gen);  lanes [0, S): += (1-p_gen)*attn
    lane_v = jax.lax.broadcasted_iota(jnp.int32, (1, EXTV_PAD), 1)
    base = jnp.where(lane_v < V, p_gen, jnp.float32(0.0))
    final_ref[:, 0:S_PAD] = base[:, 0:S_PAD] + (1.0 - p_gen) * attn
    if EXTV_PAD > S_PAD:
        final_ref[:, S_PAD:] = base[:, S_PAD:]


def decoder_lstm_decode(params, token_ids, hidden, encoder_outputs,
                        ext_vocab_size, coverage_vector):
    """Run len(token_ids) fused decoder steps (teacher forcing) in one pallas_call.

    Returns (final_dists (N, ext_vocab), coverage (1,H), (h, c), attn_weights (N, S)).
    """
    h0, c0 = hidden
    h0 = jnp.asarray(h0, jnp.float32).reshape(1, -1)                   # (1, H)
    c0 = jnp.asarray(c0, jnp.float32).reshape(1, -1)                   # (1, H)
    enc = jnp.asarray(encoder_outputs, jnp.float32)[:, 0, :]           # (S, H)
    cov0 = jnp.asarray(coverage_vector, jnp.float32).reshape(1, -1)    # (1, H)

    token_ids = jnp.asarray(token_ids, jnp.int32).reshape(-1)
    N = int(token_ids.shape[0])
    H = h0.shape[1]
    S = enc.shape[0]
    V = params["b_out"].shape[1]        # vocab_size (layer1 itself is dead code)
    assert H % 8 == 0, "weight-slab packing assumes H is a multiple of 8"
    assert S == H, "source's coverage_vector += attn.view(-1, H) requires S == H"

    S_PAD = max(_round_up(S, 128), 128)
    EXTV_PAD = max(_round_up(max(ext_vocab_size, V), 128), S_PAD)

    # ---- host-side one-time weight packing (few resident slabs, not many tiny DMAs) ----
    def pad_rows(a, rows):
        return jnp.pad(a, ((0, rows - a.shape[0]), (0, 0)))

    w_pg = params["w_pgen_t"].reshape(4, H)                    # rows: [ctx, h, emb, cov-fill]
    w_h = jnp.concatenate([
        params["w_fc_hidden_t"],                               # rows [0,   H)
        params["w_coverage_t"],                                # rows [H,  2H)
        params["w_fc_encoder_t"],                              # rows [2H, 3H)
        pad_rows(params["attn_v"], 8),                         # row   3H
        pad_rows(w_pg, 8),                                     # rows [3H+8, 3H+12)
    ], axis=0).astype(jnp.float32)                             # (3H+16, H)

    b_gates = (params["b_ih"] + params["b_hh"]).reshape(1, 4 * H)
    w_g = jnp.concatenate([
        params["w_ih_t"],                                      # rows [0, 2H)  [emb; ctx]
        params["w_hh_t"],                                      # rows [2H, 3H)
        pad_rows(b_gates, 8),                                  # row   3H
    ], axis=0).astype(jnp.float32)                             # (3H+8, 4H)

    emb_table = params["embedding"].astype(jnp.float32).reshape(-1, 1, H)
    state0 = jnp.concatenate([h0, c0, cov0], axis=0)           # (3, H)
    enc_pad = jnp.pad(enc, ((0, S_PAD - S), (0, 0)))           # (S_PAD, H)
    b_pg = params["b_pgen"].astype(jnp.float32).reshape(1, 1)

    kernel = functools.partial(decoder_fused_kernel, seq_len=S, vocab_size=V)

    grid_spec = pltpu.PrefetchScalarGridSpec(
        num_scalar_prefetch=1,                                  # token ids in SMEM
        grid=(N,),                                              # one iteration per decode step
        in_specs=[
            pl.BlockSpec((None, 1, H), lambda i, ids: (ids[i], 0, 0)),   # embedding row gather
            pl.BlockSpec((3, H), lambda i, ids: (0, 0)),                 # initial [h;c;cov]
            pl.BlockSpec((S_PAD, H), lambda i, ids: (0, 0)),             # encoder outputs (resident)
            pl.BlockSpec(w_h.shape, lambda i, ids: (0, 0)),              # H-wide weight slab (resident)
            pl.BlockSpec(w_g.shape, lambda i, ids: (0, 0)),              # 4H-wide weight slab (resident)
            pl.BlockSpec(memory_space=pltpu.MemorySpace.SMEM),           # p_gen bias scalar
        ],
        out_specs=(
            pl.BlockSpec((None, 1, EXTV_PAD), lambda i, ids: (i, 0, 0)),  # per-step final_dist
            pl.BlockSpec((None, 1, S_PAD), lambda i, ids: (i, 0, 0)),     # per-step attn weights
            pl.BlockSpec((3, H), lambda i, ids: (0, 0)),                  # final [h;c;cov]
        ),
        scratch_shapes=[
            pltpu.VMEM((S_PAD, H), jnp.float32),   # enc @ W_fc_encoder (loop-invariant)
            pltpu.VMEM((3, H), jnp.float32),       # carried [h; c; coverage]
        ],
    )

    out_shape = (
        jax.ShapeDtypeStruct((N, 1, EXTV_PAD), jnp.float32),
        jax.ShapeDtypeStruct((N, 1, S_PAD), jnp.float32),
        jax.ShapeDtypeStruct((3, H), jnp.float32),
    )

    per_step_flops = 2 * (2 * H * H + 2 * S_PAD * H + 3 * H * 4 * H + 4 * H)
    cost = pl.CostEstimate(
        flops=int(N * per_step_flops + 2 * S_PAD * H * H),
        transcendentals=int(N * (S_PAD * H + S_PAD + 5 * H + 2)),
        bytes_accessed=int(4 * (w_h.size + w_g.size + enc_pad.size + state0.size + 1
                                + N * (H + EXTV_PAD + S_PAD) + 3 * H)),
    )

    final_p, attn_p, state_out = pl.pallas_call(
        kernel,
        grid_spec=grid_spec,
        out_shape=out_shape,
        compiler_params=pltpu.CompilerParams(
            dimension_semantics=("arbitrary",),     # steps carry state -> sequential
        ),
        cost_estimate=cost,
    )(token_ids, emb_table, state0, enc_pad, w_h, w_g, b_pg)

    final = final_p.reshape(N, EXTV_PAD)[:, :ext_vocab_size]
    attn = attn_p.reshape(N, S_PAD)[:, :S]
    h_new = state_out[0:1]
    c_new = state_out[1:2]
    cov_new = state_out[2:3]
    return final, cov_new, (h_new, c_new), attn


def decoder_lstm_forward(params, inputs, hidden, encoder_outputs,
                         ext_vocab_size, coverage_vector):
    """Module-faithful single decoder step: the fused kernel with N=1."""
    token = jnp.asarray(inputs, jnp.int32).reshape(1)
    return decoder_lstm_decode(params, token, hidden, encoder_outputs,
                               ext_vocab_size, coverage_vector)


def _reference_step(params, tok, h, c, cov, enc, ext_vocab_size):
    """Pure-JAX single step mirroring the kernel's fidelity decisions."""
    H = h.shape[1]
    S = enc.shape[0]
    V = params["b_out"].shape[1]
    emb = params["embedding"][tok].reshape(1, H)
    x = jnp.tanh(h @ params["w_fc_hidden_t"] + enc @ params["w_fc_encoder_t"]
                 + cov @ params["w_coverage_t"])
    scores = (x @ params["attn_v"].T).reshape(1, S)
    attn = jax.nn.softmax(scores, axis=1)
    context = attn @ enc
    gates = (jnp.concatenate([emb, context], axis=1) @ params["w_ih_t"]
             + h @ params["w_hh_t"] + params["b_ih"] + params["b_hh"])
    i_g = jax.nn.sigmoid(gates[:, :H])
    f_g = jax.nn.sigmoid(gates[:, H:2 * H])
    g_g = jnp.tanh(gates[:, 2 * H:3 * H])
    o_g = jax.nn.sigmoid(gates[:, 3 * H:])
    c_new = f_g * c + i_g * g_g
    h_new = o_g * jnp.tanh(c_new)
    cov_new = cov + attn.reshape(1, H)
    pg_in = jnp.concatenate([context, h, emb, cov], axis=1)
    p_gen = jax.nn.sigmoid(pg_in @ params["w_pgen_t"] + params["b_pgen"])
    final = jnp.zeros((1, ext_vocab_size), jnp.float32).at[:, :V].set(p_gen)
    final = final.at[:, :S].add((1.0 - p_gen) * attn)
    return final, cov_new, h_new, c_new, attn


if __name__ == "__main__":
    H = 32               # hidden_size
    S = 32               # encoder seq length (== H, required by the source's reshapes)
    vocab_size = 48
    ext_vocab_size = 64

    key = jax.random.PRNGKey(0)
    ks = jax.random.split(key, 16)

    def rnd(k, shape, scale=0.1):
        return jax.random.normal(k, shape, dtype=jnp.float32) * scale

    params = {
        "embedding":      rnd(ks[0], (vocab_size, H)),     # nn.Embedding(vocab, H)
        "w_fc_hidden_t":  rnd(ks[1], (H, H)),              # fc_hidden.weight.T
        "w_fc_encoder_t": rnd(ks[2], (H, H)),              # fc_encoder.weight.T
        "w_coverage_t":   rnd(ks[3], (H, H)),              # coveragelayer.weight.T
        "attn_v":         rnd(ks[4], (1, H)),              # self.weight
        "w_ih_t":         rnd(ks[5], (2 * H, 4 * H)),      # lstm.weight_ih_l0.T
        "w_hh_t":         rnd(ks[6], (H, 4 * H)),          # lstm.weight_hh_l0.T
        "b_ih":           rnd(ks[7], (1, 4 * H)),
        "b_hh":           rnd(ks[8], (1, 4 * H)),
        "w_out_t":        rnd(ks[9], (H, vocab_size)),     # layer1.weight.T (dead code)
        "b_out":          rnd(ks[10], (1, vocab_size)),    # layer1.bias     (dead code)
        "w_pgen_t":       rnd(ks[11], (4 * H, 1)),         # p_gen_fc.weight.T
        "b_pgen":         rnd(ks[12], (1, 1)),
    }

    inputs = jnp.array(3, dtype=jnp.int32)                 # current decoder token id
    h0 = rnd(ks[13], (1, 1, H))                            # (n_layers, batch, H)
    c0 = rnd(ks[14], (1, 1, H))
    encoder_outputs = rnd(ks[15], (S, 1, H))
    coverage_vector = jnp.zeros((1, H), dtype=jnp.float32)

    # --- module-faithful single-step forward (fused kernel, N=1) ---
    outs = decoder_lstm_forward(params, inputs, (h0, c0), encoder_outputs,
                                ext_vocab_size, coverage_vector)
    jax.block_until_ready(outs)

    # --- fused multi-step decode: amortizes launch + weight DMA over steps ---
    tokens = jnp.array([3, 7, 11, 5], dtype=jnp.int32)
    finals, cov_m, (h_m, c_m), attn_m = decoder_lstm_decode(
        params, tokens, (h0, c0), encoder_outputs, ext_vocab_size, coverage_vector)
    jax.block_until_ready((finals, cov_m, h_m, c_m, attn_m))

    # --- pure-JAX reference check (same fidelity decisions) ---
    enc = encoder_outputs[:, 0, :]
    h, c, cov = h0.reshape(1, H), c0.reshape(1, H), coverage_vector.reshape(1, H)
    ref_finals, ref_attns = [], []
    for t in np.asarray(tokens).tolist():
        f_r, cov, h, c, a_r = _reference_step(params, int(t), h, c, cov, enc,
                                              ext_vocab_size)
        ref_finals.append(f_r)
        ref_attns.append(a_r)
    ref_finals = jnp.concatenate(ref_finals, axis=0)
    ref_attns = jnp.concatenate(ref_attns, axis=0)

    np.testing.assert_allclose(np.asarray(finals), np.asarray(ref_finals),
                               rtol=1e-3, atol=1e-3)
    np.testing.assert_allclose(np.asarray(attn_m), np.asarray(ref_attns),
                               rtol=1e-3, atol=1e-3)
    np.testing.assert_allclose(np.asarray(cov_m), np.asarray(cov), rtol=1e-3, atol=1e-3)
    np.testing.assert_allclose(np.asarray(h_m), np.asarray(h), rtol=1e-3, atol=1e-3)
    np.testing.assert_allclose(np.asarray(c_m), np.asarray(c), rtol=1e-3, atol=1e-3)
    # single-step forward == first fused step
    np.testing.assert_allclose(np.asarray(outs[0]), np.asarray(ref_finals[0:1]),
                               rtol=1e-3, atol=1e-3)

    print("KERNEL_OK")
</pallas_src>

<mosaic_0001>
module attributes {stable_mosaic.version = 11 : i64} {
  func.func @decoder_fused_kernel(%arg0: i32, %arg1: memref<1xi32, #tpu.memory_space<smem>>, %arg2: memref<1x1x32xf32, #tpu.memory_space<vmem>>, %arg3: memref<3x32xf32, #tpu.memory_space<vmem>>, %arg4: memref<128x32xf32, #tpu.memory_space<vmem>>, %arg5: memref<112x32xf32, #tpu.memory_space<vmem>>, %arg6: memref<104x128xf32, #tpu.memory_space<vmem>>, %arg7: memref<1x1xf32, #tpu.memory_space<smem>>, %arg8: memref<1x1x128xf32, #tpu.memory_space<vmem>>, %arg9: memref<1x1x128xf32, #tpu.memory_space<vmem>>, %arg10: memref<3x32xf32, #tpu.memory_space<vmem>>, %arg11: memref<128x32xf32, #tpu.memory_space<vmem>>, %arg12: memref<3x32xf32, #tpu.memory_space<vmem>>) attributes {dimension_semantics = [#tpu.dimension_semantics<arbitrary>], iteration_bounds = array<i64: 1>, scalar_prefetch = 1 : i64, scratch_operands = 2 : i64, tpu.core_type = #tpu.core_type<tc>, window_params = [{transform_indices = @transform_0, window_bounds = array<i64: 1, 1, 32>}, {pipeline_mode = #tpu.pipeline_mode<synchronous>, transform_indices = @transform_1, window_bounds = array<i64: 3, 32>}, {pipeline_mode = #tpu.pipeline_mode<synchronous>, transform_indices = @transform_2, window_bounds = array<i64: 128, 32>}, {pipeline_mode = #tpu.pipeline_mode<synchronous>, transform_indices = @transform_3, window_bounds = array<i64: 112, 32>}, {pipeline_mode = #tpu.pipeline_mode<synchronous>, transform_indices = @transform_4, window_bounds = array<i64: 104, 128>}, {transform_indices = @transform_5, window_bounds = array<i64: 1, 1>}, {transform_indices = @transform_6, window_bounds = array<i64: 1, 1, 128>}, {transform_indices = @transform_7, window_bounds = array<i64: 1, 1, 128>}, {pipeline_mode = #tpu.pipeline_mode<synchronous>, transform_indices = @transform_8, window_bounds = array<i64: 3, 32>}]} {
    %c0_i32 = arith.constant 0 : i32
    %0 = arith.cmpi eq, %arg0, %c0_i32 : i32
    %1 = arith.extui %0 : i1 to i32
    %c0_i32_0 = arith.constant 0 : i32
    %2 = arith.cmpi ne, %1, %c0_i32_0 : i32
    scf.if %2 {
      %c0_44 = arith.constant 0 : index
      %c0_45 = arith.constant 0 : index
      %108 = vector.load %arg3[%c0_44, %c0_45] : memref<3x32xf32, #tpu.memory_space<vmem>>, vector<3x32xf32>
      %c0_46 = arith.constant 0 : index
      %c0_47 = arith.constant 0 : index
      %109 = vector.load %arg12[%c0_46, %c0_47] : memref<3x32xf32, #tpu.memory_space<vmem>>, vector<3x32xf32>
      tpu.vector_store %arg12[%c0_46, %c0_47], %108 {strides = array<i32>} : memref<3x32xf32, #tpu.memory_space<vmem>>, vector<3x32xf32>,
      %c0_48 = arith.constant 0 : index
      %c0_49 = arith.constant 0 : index
      %110 = vector.load %arg4[%c0_48, %c0_49] : memref<128x32xf32, #tpu.memory_space<vmem>>, vector<128x32xf32>
      %c64 = arith.constant 64 : index
      %c0_50 = arith.constant 0 : index
      %111 = vector.load %arg5[%c64, %c0_50] : memref<112x32xf32, #tpu.memory_space<vmem>>, vector<32x32xf32>
      %cst_51 = arith.constant dense<0.000000e+00> : vector<128x32xf32>
      %112 = tpu.matmul %110, %111, %cst_51 {dimension_numbers = #tpu.dot_dimension_numbers<[1], [0], [0], [1], [0, 0, 1, 1], [], []>} : vector<128x32xf32>, vector<32x32xf32>, vector<128x32xf32> -> vector<128x32xf32>
      %c0_52 = arith.constant 0 : index
      %c0_53 = arith.constant 0 : index
      %113 = vector.load %arg11[%c0_52, %c0_53] : memref<128x32xf32, #tpu.memory_space<vmem>>, vector<128x32xf32>
      tpu.vector_store %arg11[%c0_52, %c0_53], %112 {strides = array<i32>} : memref<128x32xf32, #tpu.memory_space<vmem>>, vector<128x32xf32>,
    } else {
    }
    %c0 = arith.constant 0 : index
    %c0_1 = arith.constant 0 : index
    %c0_2 = arith.constant 0 : index
    %3 = vector.load %arg2[%c0, %c0_1, %c0_2] : memref<1x1x32xf32, #tpu.memory_space<vmem>>, vector<1x1x32xf32>
    %4 = vector.shape_cast %3 : vector<1x1x32xf32> to vector<1x32xf32>
    %c0_3 = arith.constant 0 : index
    %c0_4 = arith.constant 0 : index
    %5 = vector.load %arg12[%c0_3, %c0_4] : memref<3x32xf32, #tpu.memory_space<vmem>>, vector<1x32xf32>
    %c1 = arith.constant 1 : index
    %c0_5 = arith.constant 0 : index
    %6 = vector.load %arg12[%c1, %c0_5] : memref<3x32xf32, #tpu.memory_space<vmem>>, vector<1x32xf32>
    %c2 = arith.constant 2 : index
    %c0_6 = arith.constant 0 : index
    %7 = vector.load %arg12[%c2, %c0_6] : memref<3x32xf32, #tpu.memory_space<vmem>>, vector<1x32xf32>
    %8 = tpu.concatenate %5, %7 in 1 : vector<1x32xf32>, vector<1x32xf32> -> vector<1x64xf32>
    %c0_7 = arith.constant 0 : index
    %c0_8 = arith.constant 0 : index
    %9 = vector.load %arg11[%c0_7, %c0_8] : memref<128x32xf32, #tpu.memory_space<vmem>>, vector<128x32xf32>
    %c0_9 = arith.constant 0 : index
    %c0_10 = arith.constant 0 : index
    %10 = vector.load %arg5[%c0_9, %c0_10] : memref<112x32xf32, #tpu.memory_space<vmem>>, vector<64x32xf32>
    %cst = arith.constant dense<0.000000e+00> : vector<1x32xf32>
    %11 = tpu.matmul %8, %10, %cst {dimension_numbers = #tpu.dot_dimension_numbers<[1], [0], [0], [1], [0, 0, 1, 1], [], []>} : vector<1x64xf32>, vector<64x32xf32>, vector<1x32xf32> -> vector<1x32xf32>
    %12 = vector.broadcast %11 : vector<1x32xf32> to vector<128x32xf32>
    %13 = arith.addf %9, %12 : vector<128x32xf32>
    %14 = math.tanh %13 : vector<128x32xf32>
    %c96 = arith.constant 96 : index
    %c0_11 = arith.constant 0 : index
    %15 = vector.load %arg5[%c96, %c0_11] : memref<112x32xf32, #tpu.memory_space<vmem>>, vector<1x32xf32>
    %cst_12 = arith.constant dense<0.000000e+00> : vector<1x128xf32>
    %16 = tpu.matmul %15, %14, %cst_12 {dimension_numbers = #tpu.dot_dimension_numbers<[1], [1], [0], [0], [0, 0, 1, 0], [], []>} : vector<1x32xf32>, vector<128x32xf32>, vector<1x128xf32> -> vector<1x128xf32>
    %17 = tpu.iota {dimensions = array<i32: 1>} : vector<1x128xi32>
    %c32_i32 = arith.constant 32 : i32
    %18 = vector.broadcast %c32_i32 : i32 to vector<1x128xi32>
    %19 = arith.cmpi slt, %17, %18 : vector<1x128xi32>
    %cst_13 = arith.constant -1.000000e+30 : f32
    %20 = vector.broadcast %cst_13 : f32 to vector<1x128xf32>
    %21 = arith.select %19, %16, %20 : vector<1x128xi1>, vector<1x128xf32>
    %cst_14 = arith.constant dense<0xFF800000> : vector<1xf32>
    %22 = vector.multi_reduction <maximumf>, %21, %cst_14 [1] : vector<1x128xf32> to vector<1xf32>
    %23 = vector.shape_cast %22 : vector<1xf32> to vector<1x1xf32>
    %24 = vector.broadcast %23 : vector<1x1xf32> to vector<1x128xf32>
    %25 = arith.subf %21, %24 : vector<1x128xf32>
    %26 = math.exp %25 : vector<1x128xf32>
    %cst_15 = arith.constant dense<0.000000e+00> : vector<1xf32>
    %27 = vector.multi_reduction <add>, %26, %cst_15 [1] : vector<1x128xf32> to vector<1xf32>
    %28 = vector.shape_cast %27 : vector<1xf32> to vector<1x1xf32>
    %29 = vector.broadcast %28 : vector<1x1xf32> to vector<1x128xf32>
    %30 = arith.divf %26, %29 : vector<1x128xf32>
    %c0_16 = arith.constant 0 : index
    %c0_17 = arith.constant 0 : index
    %31 = vector.load %arg4[%c0_16, %c0_17] : memref<128x32xf32, #tpu.memory_space<vmem>>, vector<128x32xf32>
    %cst_18 = arith.constant dense<0.000000e+00> : vector<1x32xf32>
    %32 = tpu.matmul %30, %31, %cst_18 {dimension_numbers = #tpu.dot_dimension_numbers<[1], [0], [0], [1], [0, 0, 1, 1], [], []>} : vector<1x128xf32>, vector<128x32xf32>, vector<1x32xf32> -> vector<1x32xf32>
    %33 = tpu.concatenate %4, %32, %5 in 1 : vector<1x32xf32>, vector<1x32xf32>, vector<1x32xf32> -> vector<1x96xf32>
    %c0_19 = arith.constant 0 : index
    %c0_20 = arith.constant 0 : index
    %34 = vector.load %arg6[%c0_19, %c0_20] : memref<104x128xf32, #tpu.memory_space<vmem>>, vector<96x128xf32>
    %cst_21 = arith.constant dense<0.000000e+00> : vector<1x128xf32>
    %35 = tpu.matmul %33, %34, %cst_21 {dimension_numbers = #tpu.dot_dimension_numbers<[1], [0], [0], [1], [0, 0, 1, 1], [], []>} : vector<1x96xf32>, vector<96x128xf32>, vector<1x128xf32> -> vector<1x128xf32>
    %c96_22 = arith.constant 96 : index
    %c0_23 = arith.constant 0 : index
    %36 = vector.load %arg6[%c96_22, %c0_23] : memref<104x128xf32, #tpu.memory_space<vmem>>, vector<1x128xf32>
    %37 = arith.addf %35, %36 : vector<1x128xf32>
    %38 = vector.extract_strided_slice %37 {offsets = [0, 0], sizes = [1, 32], strides = [1, 1]} : vector<1x128xf32> to vector<1x32xf32>
    %39 = arith.negf %38 : vector<1x32xf32>
    %40 = math.exp %39 : vector<1x32xf32>
    %cst_24 = arith.constant 1.000000e+00 : f32
    %41 = vector.broadcast %cst_24 : f32 to vector<1x32xf32>
    %42 = arith.addf %41, %40 : vector<1x32xf32>
    %43 = arith.divf %41, %42 : vector<1x32xf32>
    %44 = vector.extract_strided_slice %37 {offsets = [0, 32], sizes = [1, 32], strides = [1, 1]} : vector<1x128xf32> to vector<1x32xf32>
    %45 = arith.negf %44 : vector<1x32xf32>
    %46 = math.exp %45 : vector<1x32xf32>
    %cst_25 = arith.constant 1.000000e+00 : f32
    %47 = vector.broadcast %cst_25 : f32 to vector<1x32xf32>
    %48 = arith.addf %47, %46 : vector<1x32xf32>
    %49 = arith.divf %47, %48 : vector<1x32xf32>
    %50 = vector.extract_strided_slice %37 {offsets = [0, 64], sizes = [1, 32], strides = [1, 1]} : vector<1x128xf32> to vector<1x32xf32>
    %51 = math.tanh %50 : vector<1x32xf32>
    %52 = vector.extract_strided_slice %37 {offsets = [0, 96], sizes = [1, 32], strides = [1, 1]} : vector<1x128xf32> to vector<1x32xf32>
    %53 = arith.negf %52 : vector<1x32xf32>
    %54 = math.exp %53 : vector<1x32xf32>
    %cst_26 = arith.constant 1.000000e+00 : f32
    %55 = vector.broadcast %cst_26 : f32 to vector<1x32xf32>
    %56 = arith.addf %55, %54 : vector<1x32xf32>
    %57 = arith.divf %55, %56 : vector<1x32xf32>
    %58 = arith.mulf %49, %6 : vector<1x32xf32>
    %59 = arith.mulf %43, %51 : vector<1x32xf32>
    %60 = arith.addf %58, %59 : vector<1x32xf32>
    %61 = math.tanh %60 : vector<1x32xf32>
    %62 = arith.mulf %57, %61 : vector<1x32xf32>
    %63 = vector.extract_strided_slice %30 {offsets = [0, 0], sizes = [1, 32], strides = [1, 1]} : vector<1x128xf32> to vector<1x32xf32>
    %64 = arith.addf %7, %63 : vector<1x32xf32>
    %c104 = arith.constant 104 : index
    %c0_27 = arith.constant 0 : index
    %65 = vector.load %arg5[%c104, %c0_27] : memref<112x32xf32, #tpu.memory_space<vmem>>, vector<4x32xf32>
    %66 = vector.extract_strided_slice %65 {offsets = [0, 0], sizes = [1, 32], strides = [1, 1]} : vector<4x32xf32> to vector<1x32xf32>
    %67 = arith.mulf %32, %66 : vector<1x32xf32>
    %68 = vector.extract_strided_slice %65 {offsets = [1, 0], sizes = [1, 32], strides = [1, 1]} : vector<4x32xf32> to vector<1x32xf32>
    %69 = arith.mulf %5, %68 : vector<1x32xf32>
    %70 = arith.addf %67, %69 : vector<1x32xf32>
    %71 = vector.extract_strided_slice %65 {offsets = [2, 0], sizes = [1, 32], strides = [1, 1]} : vector<4x32xf32> to vector<1x32xf32>
    %72 = arith.mulf %4, %71 : vector<1x32xf32>
    %73 = arith.addf %70, %72 : vector<1x32xf32>
    %74 = vector.extract_strided_slice %65 {offsets = [3, 0], sizes = [1, 32], strides = [1, 1]} : vector<4x32xf32> to vector<1x32xf32>
    %75 = arith.mulf %7, %74 : vector<1x32xf32>
    %76 = arith.addf %73, %75 : vector<1x32xf32>
    %cst_28 = arith.constant dense<0.000000e+00> : vector<1xf32>
    %77 = vector.multi_reduction <add>, %76, %cst_28 [1] : vector<1x32xf32> to vector<1xf32>
    %78 = vector.shape_cast %77 : vector<1xf32> to vector<1x1xf32>
    %c0_29 = arith.constant 0 : index
    %c0_30 = arith.constant 0 : index
    %79 = memref.load %arg7[%c0_29, %c0_30] : memref<1x1xf32, #tpu.memory_space<smem>>
    %80 = vector.broadcast %79 : f32 to vector<1x1xf32>
    %81 = arith.addf %78, %80 : vector<1x1xf32>
    %82 = arith.negf %81 : vector<1x1xf32>
    %83 = math.exp %82 : vector<1x1xf32>
    %cst_31 = arith.constant 1.000000e+00 : f32
    %84 = vector.broadcast %cst_31 : f32 to vector<1x1xf32>
    %85 = arith.addf %84, %83 : vector<1x1xf32>
    %86 = arith.divf %84, %85 : vector<1x1xf32>
    %c0_32 = arith.constant 0 : index
    %c0_33 = arith.constant 0 : index
    %c0_34 = arith.constant 0 : index
    %87 = vector.load %arg9[%c0_32, %c0_33, %c0_34] : memref<1x1x128xf32, #tpu.memory_space<vmem>>, vector<1x1x128xf32>
    %88 = vector.shape_cast %87 : vector<1x1x128xf32> to vector<1x128xf32>
    %89 = vector.shape_cast %30 : vector<1x128xf32> to vector<1x1x128xf32>
    tpu.vector_store %arg9[%c0_32, %c0_33, %c0_34], %89 {strides = array<i32>} : memref<1x1x128xf32, #tpu.memory_space<vmem>>, vector<1x1x128xf32>,
    %90 = tpu.concatenate %62, %60, %64 in 0 : vector<1x32xf32>, vector<1x32xf32>, vector<1x32xf32> -> vector<3x32xf32>
    %c0_35 = arith.constant 0 : index
    %c0_36 = arith.constant 0 : index
    %91 = vector.load %arg12[%c0_35, %c0_36] : memref<3x32xf32, #tpu.memory_space<vmem>>, vector<3x32xf32>
    tpu.vector_store %arg12[%c0_35, %c0_36], %90 {strides = array<i32>} : memref<3x32xf32, #tpu.memory_space<vmem>>, vector<3x32xf32>,
    %c0_37 = arith.constant 0 : index
    %c0_38 = arith.constant 0 : index
    %92 = vector.load %arg10[%c0_37, %c0_38] : memref<3x32xf32, #tpu.memory_space<vmem>>, vector<3x32xf32>
    tpu.vector_store %arg10[%c0_37, %c0_38], %90 {strides = array<i32>} : memref<3x32xf32, #tpu.memory_space<vmem>>, vector<3x32xf32>,
    %93 = tpu.iota {dimensions = array<i32: 1>} : vector<1x128xi32>
    %c48_i32 = arith.constant 48 : i32
    %94 = vector.broadcast %c48_i32 : i32 to vector<1x128xi32>
    %95 = arith.cmpi slt, %93, %94 : vector<1x128xi32>
    %cst_39 = arith.constant 0.000000e+00 : f32
    %96 = vector.shape_cast %86 : vector<1x1xf32> to vector<1x1xf32>
    %97 = vector.broadcast %96 : vector<1x1xf32> to vector<1x128xf32>
    %98 = vector.broadcast %cst_39 : f32 to vector<1x128xf32>
    %99 = arith.select %95, %97, %98 : vector<1x128xi1>, vector<1x128xf32>
    %cst_40 = arith.constant 1.000000e+00 : f32
    %100 = vector.broadcast %cst_40 : f32 to vector<1x1xf32>
    %101 = arith.subf %100, %86 : vector<1x1xf32>
    %102 = vector.broadcast %101 : vector<1x1xf32> to vector<1x128xf32>
    %103 = arith.mulf %102, %30 : vector<1x128xf32>
    %104 = arith.addf %99, %103 : vector<1x128xf32>
    %c0_41 = arith.constant 0 : index
    %c0_42 = arith.constant 0 : index
    %c0_43 = arith.constant 0 : index
    %105 = vector.load %arg8[%c0_41, %c0_42, %c0_43] : memref<1x1x128xf32, #tpu.memory_space<vmem>>, vector<1x1x128xf32>
    %106 = vector.shape_cast %105 : vector<1x1x128xf32> to vector<1x128xf32>
    %107 = vector.shape_cast %104 : vector<1x128xf32> to vector<1x1x128xf32>
    tpu.vector_store %arg8[%c0_41, %c0_42, %c0_43], %107 {strides = array<i32>} : memref<1x1x128xf32, #tpu.memory_space<vmem>>, vector<1x1x128xf32>,
    return
  }
  func.func @transform_0(%arg0: i32, %arg1: memref<1xi32, #tpu.memory_space<smem>>) -> (i32, i32, i32) {
    %0 = arith.index_cast %arg0 : i32 to index
    %1 = memref.load %arg1[%0] : memref<1xi32, #tpu.memory_space<smem>>
    %c0_i32 = arith.constant 0 : i32
    %c0_i32_0 = arith.constant 0 : i32
    %c0_i32_1 = arith.constant 0 : i32
    return %1, %c0_i32, %c0_i32_0 : i32, i32, i32
  }
  func.func @transform_1(%arg0: i32, %arg1: memref<1xi32, #tpu.memory_space<smem>>) -> (i32, i32) {
    %c0_i32 = arith.constant 0 : i32
    %c0_i32_0 = arith.constant 0 : i32
    %c0_i32_1 = arith.constant 0 : i32
    return %c0_i32, %c0_i32_0 : i32, i32
  }
  func.func @transform_2(%arg0: i32, %arg1: memref<1xi32, #tpu.memory_space<smem>>) -> (i32, i32) {
    %c0_i32 = arith.constant 0 : i32
    %c0_i32_0 = arith.constant 0 : i32
    %c0_i32_1 = arith.constant 0 : i32
    return %c0_i32, %c0_i32_0 : i32, i32
  }
  func.func @transform_3(%arg0: i32, %arg1: memref<1xi32, #tpu.memory_space<smem>>) -> (i32, i32) {
    %c0_i32 = arith.constant 0 : i32
    %c0_i32_0 = arith.constant 0 : i32
    %c0_i32_1 = arith.constant 0 : i32
    return %c0_i32, %c0_i32_0 : i32, i32
  }
  func.func @transform_4(%arg0: i32, %arg1: memref<1xi32, #tpu.memory_space<smem>>) -> (i32, i32) {
    %c0_i32 = arith.constant 0 : i32
    %c0_i32_0 = arith.constant 0 : i32
    %c0_i32_1 = arith.constant 0 : i32
    return %c0_i32, %c0_i32_0 : i32, i32
  }
  func.func @transform_5(%arg0: i32, %arg1: memref<1xi32, #tpu.memory_space<smem>>) -> (i32, i32) {
    %c0_i32 = arith.constant 0 : i32
    %c0_i32_0 = arith.constant 0 : i32
    %c0_i32_1 = arith.constant 0 : i32
    return %c0_i32, %c0_i32_0 : i32, i32
  }
  func.func @transform_6(%arg0: i32, %arg1: memref<1xi32, #tpu.memory_space<smem>>) -> (i32, i32, i32) {
    %c0_i32 = arith.constant 0 : i32
    %c0_i32_0 = arith.constant 0 : i32
    %c0_i32_1 = arith.constant 0 : i32
    return %arg0, %c0_i32, %c0_i32_0 : i32, i32, i32
  }
  func.func @transform_7(%arg0: i32, %arg1: memref<1xi32, #tpu.memory_space<smem>>) -> (i32, i32, i32) {
    %c0_i32 = arith.constant 0 : i32
    %c0_i32_0 = arith.constant 0 : i32
    %c0_i32_1 = arith.constant 0 : i32
    return %arg0, %c0_i32, %c0_i32_0 : i32, i32, i32
  }
  func.func @transform_8(%arg0: i32, %arg1: memref<1xi32, #tpu.memory_space<smem>>) -> (i32, i32) {
    %c0_i32 = arith.constant 0 : i32
    %c0_i32_0 = arith.constant 0 : i32
    %c0_i32_1 = arith.constant 0 : i32
    return %c0_i32, %c0_i32_0 : i32, i32
  }
}

</mosaic_0001>

<llo_original>
// kernel: tpu_custom_call.1
$region0: #{tpu_custom_call.1}
  #allocation0 [shape = 'u32[]', space=smem, size = 0x4, offset = 0x4, fixed_abs, tag = 'smem constant byte address 0x4 - core index']
  #allocation1 [shape = 'u32[144,128]{1,0:T(1,128)}', space=vmem, size = 0x12000, scoped, tag = 'internal scratch']
  #allocation2 [shape = 'f32[128,32]{1,0:T(8,128)}', space=vmem, size = 0x10000, scoped, tag = 'scratch operand']
  #allocation3 [shape = 'f32[3,32]{1,0:T(4,128)}', space=vmem, size = 0x800, scoped, tag = 'scratch operand']
  #allocation4 [shape = 's32[1]{0}', space=sflag, size = 0x4, scoped, tag = 'scoped memory for tpu_custom_call.1']
  #allocation5 [shape = 's32[1]{0:T(128)S(6)}', space=smem, size = 0x200, scoped, tag = 'prefetched SMEM operand 0']
  #allocation6 [shape = 'f32[1,1]{1,0:T(1,128)S(6)}', space=smem, size = 0x200, scoped, tag = 'scoped memory for tpu_custom_call.1']
  %s0 = inlined_call_operand.<no memory space> [shape: s32[1], index: 0, kind: input, shape index: {}]
  %s1 = inlined_call_operand.vmem [shape: f32[48,1,32], index: 1, kind: input, shape index: {}]
  %s2 = inlined_call_operand.vmem [shape: f32[3,32], index: 2, kind: input, shape index: {}]
  %s3 = inlined_call_operand.vmem [shape: f32[128,32], index: 3, kind: input, shape index: {}]
  %s4 = inlined_call_operand.vmem [shape: f32[112,32], index: 4, kind: input, shape index: {}]
  %s5 = inlined_call_operand.vmem [shape: f32[104,128], index: 5, kind: input, shape index: {}]
  %s6 = inlined_call_operand.<no memory space> [shape: f32[1,1], index: 6, kind: input, shape index: {}]
  %s7 = inlined_call_operand.hbm [shape: f32[1,1,128], index: 7, kind: output, shape index: {0}]
  %s8 = inlined_call_operand.hbm [shape: f32[1,1,128], index: 8, kind: output, shape index: {1}]
  %s9 = inlined_call_operand.hbm [shape: f32[3,32], index: 9, kind: output, shape index: {2}]
  %10 = xla_tuple %s7, %s8, %s9
  %s11 = sld [smem:[#allocation0]]
  $region54: #{tpu_custom_call.1} parent=0
    _
  %s13 = ssub.s32 1, %s11
  %s14 = scalar_select 0, %s13, %s11
  %15 = sst [smem:[#allocation5]] %s0
  %16 = sst [smem:[#allocation6]] %s6
  $region1: #{tpu_custom_call.1} parent=0
    #allocation7 [shape = 'u8[512]{0}', space=vmem, size = 0x400, scoped, tag = 'output window, operand 0, single buffered']
    #allocation8 [shape = 's32[1]{0}', space=sflag, size = 0x4, scoped, tag = 'scoped memory for tpu_custom_call.1']
    #allocation9 [shape = 'u8[512]{0}', space=vmem, size = 0x400, scoped, tag = 'output window, operand 1, single buffered']
    #allocation10 [shape = 's32[1]{0}', space=sflag, size = 0x4, scoped, tag = 'scoped memory for tpu_custom_call.1']
    #allocation11 [shape = 'u8[2048]{0}', space=vmem, size = 0x800, scoped, tag = 'output window, operand 2, single buffered']
    %17 = vsyncpa [#allocation8], 0
    %18 = vsyncpa [#allocation10], 0
    // Predicated region
    $region2: #{tpu_custom_call.1} parent=1 // pred_check
      _
    $region3: #{tpu_custom_call.1} parent=1 // pred_check_branch
      %20 = sbr.rel (0) target = $region5
    $region4: #{tpu_custom_call.1} parent=1 // pred_region
      %s21 = sld [smem:[#allocation5]]
      %p22 = scmp.lt.s32.totalorder %s21, 47
      %s23 = scalar_select %p22, %s21, 47
      %s24 = scalar_lea.vmem %s1, %s23
      %s25 = sld [smem:[#allocation5]]
    $region5: #{tpu_custom_call.1} parent=1 // pred_fallthru
      _
    // Predicated region
    $region6: #{tpu_custom_call.1} parent=1 // pred_check
      _
    $region7: #{tpu_custom_call.1} parent=1 // pred_check_branch
      %27 = sbr.rel (0) target = $region9
    $region8: #{tpu_custom_call.1} parent=1 // pred_region
      _
    $region9: #{tpu_custom_call.1} parent=1 // pred_fallthru
      _
    // Predicated region
    $region10: #{tpu_custom_call.1} parent=1 // pred_check
      _
    $region11: #{tpu_custom_call.1} parent=1 // pred_check_branch
      %29 = sbr.rel (0) target = $region13
    $region12: #{tpu_custom_call.1} parent=1 // pred_region
      _
    $region13: #{tpu_custom_call.1} parent=1 // pred_fallthru
      _
    // Predicated region
    $region14: #{tpu_custom_call.1} parent=1 // pred_check
      _
    $region15: #{tpu_custom_call.1} parent=1 // pred_check_branch
      %31 = sbr.rel (0) target = $region17
    $region16: #{tpu_custom_call.1} parent=1 // pred_region
      _
    $region17: #{tpu_custom_call.1} parent=1 // pred_fallthru
      _
    // Predicated region
    $region18: #{tpu_custom_call.1} parent=1 // pred_check
      _
    $region19: #{tpu_custom_call.1} parent=1 // pred_check_branch
      %33 = sbr.rel (0) target = $region21
    $region20: #{tpu_custom_call.1} parent=1 // pred_region
      _
    $region21: #{tpu_custom_call.1} parent=1 // pred_fallthru
      _
    // Predicated region
    $region22: #{tpu_custom_call.1} parent=1 // pred_check
      _
    $region23: #{tpu_custom_call.1} parent=1 // pred_check_branch
      %35 = sbr.rel (0) target = $region25
    $region24: #{tpu_custom_call.1} parent=1 // pred_region
      _
    $region25: #{tpu_custom_call.1} parent=1 // pred_fallthru
      _
    %s36 = sld [smem:[#allocation5]]
    %p37 = scmp.lt.s32.totalorder %s36, 47
    %s38 = scalar_select %p37, %s36, 47
    %s39 = scalar_lea.vmem %s1, %s38
    %s40 = sld [smem:[#allocation5]]
    %p41 = scmp.lt.s32.totalorder %s40, 47
    %s42 = scalar_select %p41, %s40, 47
    %s43 = scalar_lea.vmem %s1, %s42
    %s44 = sld [smem:[#allocation5]]
    %p45 = scmp.eq.s32.totalorder 0, 0
    // Predicated region
    $region26: #{tpu_custom_call.1} parent=1 // pred_check
      %p46 = pneg %p45
    $region27: #{tpu_custom_call.1} parent=1 // pred_check_branch
      %48 = sbr.rel (%p46) target = $region29
    $region28: #{tpu_custom_call.1} parent=1 // pred_region
      %v49 = vld [vmem:[%s2] sm:$0x7]
      %vm50 = vcmask 256000
      %51 = vst.msk [vmem:[#allocation3] sm:$0x7] %vm50, %v49
      %v52 = vld [vmem:[%s3] sm:$0xff]
      %v53 = vld [vmem:[%s3 + $0x8] sm:$0xff]
      %v54 = vld [vmem:[%s3 + $0x10] sm:$0xff]
      %v55 = vld [vmem:[%s3 + $0x18] sm:$0xff]
      %v56 = vld [vmem:[%s3 + $0x20] sm:$0xff]
      %v57 = vld [vmem:[%s3 + $0x28] sm:$0xff]
      %v58 = vld [vmem:[%s3 + $0x30] sm:$0xff]
      %v59 = vld [vmem:[%s3 + $0x38] sm:$0xff]
      %v60 = vld [vmem:[%s3 + $0x40] sm:$0xff]
      %v61 = vld [vmem:[%s3 + $0x48] sm:$0xff]
      %v62 = vld [vmem:[%s3 + $0x50] sm:$0xff]
      %v63 = vld [vmem:[%s3 + $0x58] sm:$0xff]
      %v64 = vld [vmem:[%s3 + $0x60] sm:$0xff]
      %v65 = vld [vmem:[%s3 + $0x68] sm:$0xff]
      %v66 = vld [vmem:[%s3 + $0x70] sm:$0xff]
      %v67 = vld [vmem:[%s3 + $0x78] sm:$0xff]
      %v68 = vld [vmem:[%s4 + $0x40] sm:$0xff]
      %v69 = vld [vmem:[%s4 + $0x48] sm:$0xff]
      %v70 = vld [vmem:[%s4 + $0x50] sm:$0xff]
      %v71 = vld [vmem:[%s4 + $0x58] sm:$0xff]
      %vm72 = vcmask 261120
      %v74 = vsel %vm72, %v52, 0
      %v77 = vsel %vm72, %v53, 0
      %v80 = vsel %vm72, %v54, 0
      %v83 = vsel %vm72, %v55, 0
      %v86 = vsel %vm72, %v56, 0
      %v89 = vsel %vm72, %v57, 0
      %v92 = vsel %vm72, %v58, 0
      %v95 = vsel %vm72, %v59, 0
      %v98 = vsel %vm72, %v60, 0
      %v101 = vsel %vm72, %v61, 0
      %v104 = vsel %vm72, %v62, 0
      %v107 = vsel %vm72, %v63, 0
      %v110 = vsel %vm72, %v64, 0
      %v113 = vsel %vm72, %v65, 0
      %v116 = vsel %vm72, %v66, 0
      %v119 = vsel %vm72, %v67, 0
      %121 = vmatprep.subr.mxu0 0.0
      %122 = vmatpush1.msra.mxu0 %v68
      %123 = vmatprep.subr.mxu0 0.0
      %124 = vmatpush1.msra.mxu0 %v69
      %125 = vmatprep.subr.mxu0 0.0
      %126 = vmatpush1.msra.mxu0 %v70
      %127 = vmatprep.subr.mxu0 0.0
      %128 = vmatpush1.msra.mxu0 %v71
      %129 = vmatprep.subr.mxu0 0.0
      %130 = vmatpush1.msra.mxu0 0.0
      %131 = vmatprep.subr.mxu0 0.0
      %132 = vmatpush1.msra.mxu0 0.0
      %133 = vmatprep.subr.mxu0 0.0
      %134 = vmatpush1.msra.mxu0 0.0
      %135 = vmatprep.subr.mxu0 0.0
      %136 = vmatpush1.msra.mxu0 0.0
      %137 = vmatprep.subr.mxu0 0.0
      %138 = vmatpush1.msra.mxu0 0.0
      %139 = vmatprep.subr.mxu0 0.0
      %140 = vmatpush1.msra.mxu0 0.0
      %141 = vmatprep.subr.mxu0 0.0
      %142 = vmatpush1.msra.mxu0 0.0
      %143 = vmatprep.subr.mxu0 0.0
      %144 = vmatpush1.msra.mxu0 0.0
      %145 = vmatprep.subr.mxu0 0.0
      %146 = vmatpush1.msra.mxu0 0.0
      %147 = vmatprep.subr.mxu0 0.0
      %148 = vmatpush1.msra.mxu0 0.0
      %149 = vmatprep.subr.mxu0 0.0
      %150 = vmatpush1.msra.mxu0 0.0
      %151 = vmatprep.subr.mxu0 0.0
      %152 = vmatpush1.msra.mxu0 0.0
      %153 = vmatprep.subr.mxu0 0.0
      %154 = vmatpush1.msra.mxu0 0.0
      %155 = vmatprep.subr.mxu0 0.0
      %156 = vmatpush1.msra.mxu0 0.0
      %157 = vmatprep.subr.mxu0 0.0
      %158 = vmatpush1.msra.mxu0 0.0
      %159 = vmatprep.subr.mxu0 0.0
      %160 = vmatpush1.msra.mxu0 0.0
      %161 = vmatprep.subr.mxu0 0.0
      %162 = vmatpush1.msra.mxu0 0.0
      %163 = vmatprep.subr.mxu0 0.0
      %164 = vmatpush1.msra.mxu0 0.0
      %165 = vmatprep.subr.mxu0 0.0
      %166 = vmatpush1.msra.mxu0 0.0
      %167 = vmatprep.subr.mxu0 0.0
      %168 = vmatpush1.msra.mxu0 0.0
      %169 = vmatprep.subr.mxu0 0.0
      %170 = vmatpush1.msra.mxu0 0.0
      %171 = vmatprep.subr.mxu0 0.0
      %172 = vmatpush1.msra.mxu0 0.0
      %173 = vmatprep.subr.mxu0 0.0
      %174 = vmatpush1.msra.mxu0 0.0
      %175 = vmatprep.subr.mxu0 0.0
      %176 = vmatpush1.msra.mxu0 0.0
      %177 = vmatprep.subr.mxu0 0.0
      %178 = vmatpush1.msra.mxu0 0.0
      %179 = vmatprep.subr.mxu0 0.0
      %180 = vmatpush1.msra.mxu0 0.0
      %181 = vmatprep.subr.mxu0 0.0
      %182 = vmatpush1.msra.mxu0 0.0
      %183 = vmatprep.subr.mxu0 0.0
      %184 = vmatpush1.msra.mxu0 0.0
      %185 = vmatprep.mubr.f32.mxu0 0.0
      %186 = vmatmul.mubr.f32.gmra.mrb[0].mxu0 %v74
      %v187 = vpop.f32.mrb[0].mxu0
      %v188 = vadd.f32 0.0, %v187
      %v189 = vpop.f32.mrb[0].mxu0
      %190 = vmatprep.mubr.f32.mxu0 0.0
      %191 = vmatmul.mubr.f32.gmra.mrb[0].mxu0 %v77
      %v192 = vpop.f32.mrb[0].mxu0
      %v193 = vadd.f32 0.0, %v192
      %v194 = vpop.f32.mrb[0].mxu0
      %195 = vmatprep.mubr.f32.mxu0 0.0
      %196 = vmatmul.mubr.f32.gmra.mrb[0].mxu0 %v80
      %v197 = vpop.f32.mrb[0].mxu0
      %v198 = vadd.f32 0.0, %v197
      %v199 = vpop.f32.mrb[0].mxu0
      %200 = vmatprep.mubr.f32.mxu0 0.0
      %201 = vmatmul.mubr.f32.gmra.mrb[0].mxu0 %v83
      %v202 = vpop.f32.mrb[0].mxu0
      %v203 = vadd.f32 0.0, %v202
      %v204 = vpop.f32.mrb[0].mxu0
      %205 = vmatprep.mubr.f32.mxu0 0.0
      %206 = vmatmul.mubr.f32.gmra.mrb[0].mxu0 %v86
      %v207 = vpop.f32.mrb[0].mxu0
      %v208 = vadd.f32 0.0, %v207
      %v209 = vpop.f32.mrb[0].mxu0
      %210 = vmatprep.mubr.f32.mxu0 0.0
      %211 = vmatmul.mubr.f32.gmra.mrb[0].mxu0 %v89
      %v212 = vpop.f32.mrb[0].mxu0
      %v213 = vadd.f32 0.0, %v212
      %v214 = vpop.f32.mrb[0].mxu0
      %215 = vmatprep.mubr.f32.mxu0 0.0
      %216 = vmatmul.mubr.f32.gmra.mrb[0].mxu0 %v92
      %v217 = vpop.f32.mrb[0].mxu0
      %v218 = vadd.f32 0.0, %v217
      %v219 = vpop.f32.mrb[0].mxu0
      %220 = vmatprep.mubr.f32.mxu0 0.0
      %221 = vmatmul.mubr.f32.gmra.mrb[0].mxu0 %v95
      %v222 = vpop.f32.mrb[0].mxu0
      %v223 = vadd.f32 0.0, %v222
      %v224 = vpop.f32.mrb[0].mxu0
      %225 = vmatprep.mubr.f32.mxu0 0.0
      %226 = vmatmul.mubr.f32.gmra.mrb[0].mxu0 %v98
      %v227 = vpop.f32.mrb[0].mxu0
      %v228 = vadd.f32 0.0, %v227
      %v229 = vpop.f32.mrb[0].mxu0
      %230 = vmatprep.mubr.f32.mxu0 0.0
      %231 = vmatmul.mubr.f32.gmra.mrb[0].mxu0 %v101
      %v232 = vpop.f32.mrb[0].mxu0
      %v233 = vadd.f32 0.0, %v232
      %v234 = vpop.f32.mrb[0].mxu0
      %235 = vmatprep.mubr.f32.mxu0 0.0
      %236 = vmatmul.mubr.f32.gmra.mrb[0].mxu0 %v104
      %v237 = vpop.f32.mrb[0].mxu0
      %v238 = vadd.f32 0.0, %v237
      %v239 = vpop.f32.mrb[0].mxu0
      %240 = vmatprep.mubr.f32.mxu0 0.0
      %241 = vmatmul.mubr.f32.gmra.mrb[0].mxu0 %v107
      %v242 = vpop.f32.mrb[0].mxu0
      %v243 = vadd.f32 0.0, %v242
      %v244 = vpop.f32.mrb[0].mxu0
      %245 = vmatprep.mubr.f32.mxu0 0.0
      %246 = vmatmul.mubr.f32.gmra.mrb[0].mxu0 %v110
      %v247 = vpop.f32.mrb[0].mxu0
      %v248 = vadd.f32 0.0, %v247
      %v249 = vpop.f32.mrb[0].mxu0
      %250 = vmatprep.mubr.f32.mxu0 0.0
      %251 = vmatmul.mubr.f32.gmra.mrb[0].mxu0 %v113
      %v252 = vpop.f32.mrb[0].mxu0
      %v253 = vadd.f32 0.0, %v252
      %v254 = vpop.f32.mrb[0].mxu0
      %255 = vmatprep.mubr.f32.mxu0 0.0
      %256 = vmatmul.mubr.f32.gmra.mrb[0].mxu0 %v116
      %v257 = vpop.f32.mrb[0].mxu0
      %v258 = vadd.f32 0.0, %v257
      %v259 = vpop.f32.mrb[0].mxu0
      %260 = vmatprep.mubr.f32.mxu0 0.0
      %261 = vmatmul.mubr.f32.gmra.mrb[0].mxu0 %v119
      %v262 = vpop.f32.mrb[0].mxu0
      %v263 = vadd.f32 0.0, %v262
      %v264 = vpop.f32.mrb[0].mxu0
      %265 = vdwg.mxu0
      %266 = vst.msk [vmem:[#allocation2] sm:$0xff] %vm72, %v188
      %267 = vst.msk [vmem:[#allocation2 + $0x8] sm:$0xff] %vm72, %v193
      %268 = vst.msk [vmem:[#allocation2 + $0x10] sm:$0xff] %vm72, %v198
      %269 = vst.msk [vmem:[#allocation2 + $0x18] sm:$0xff] %vm72, %v203
      %270 = vst.msk [vmem:[#allocation2 + $0x20] sm:$0xff] %vm72, %v208
      %271 = vst.msk [vmem:[#allocation2 + $0x28] sm:$0xff] %vm72, %v213
      %272 = vst.msk [vmem:[#allocation2 + $0x30] sm:$0xff] %vm72, %v218
      %273 = vst.msk [vmem:[#allocation2 + $0x38] sm:$0xff] %vm72, %v223
      %274 = vst.msk [vmem:[#allocation2 + $0x40] sm:$0xff] %vm72, %v228
      %275 = vst.msk [vmem:[#allocation2 + $0x48] sm:$0xff] %vm72, %v233
      %276 = vst.msk [vmem:[#allocation2 + $0x50] sm:$0xff] %vm72, %v238
      %277 = vst.msk [vmem:[#allocation2 + $0x58] sm:$0xff] %vm72, %v243
      %278 = vst.msk [vmem:[#allocation2 + $0x60] sm:$0xff] %vm72, %v248
      %279 = vst.msk [vmem:[#allocation2 + $0x68] sm:$0xff] %vm72, %v253
      %280 = vst.msk [vmem:[#allocation2 + $0x70] sm:$0xff] %vm72, %v258
      %281 = vst.msk [vmem:[#allocation2 + $0x78] sm:$0xff] %vm72, %v263
    $region29: #{tpu_custom_call.1} parent=1 // pred_fallthru
      _
    %v282 = vld [vmem:[%s43] sm:$0x1]
    %v283 = vld [vmem:[#allocation3] sm:$0x1]
    %v284 = vld [vmem:[#allocation3 + $0x1] sm:$0x1]
    %v285 = vld [vmem:[#allocation3 + $0x2] sm:$0x1]
    %287 = vrot.lane.b32.xlu0 %v285, 32
    %v288 = vpop.permute.xlu0 %287
    %vm290 = vcmask 261120
    %v291 = vsel %vm290, %v283, %v288
    %v292 = vld [vmem:[#allocation2] sm:$0xff]
    %v293 = vld [vmem:[#allocation2 + $0x8] sm:$0xff]
    %v294 = vld [vmem:[#allocation2 + $0x10] sm:$0xff]
    %v295 = vld [vmem:[#allocation2 + $0x18] sm:$0xff]
    %v296 = vld [vmem:[#allocation2 + $0x20] sm:$0xff]
    %v297 = vld [vmem:[#allocation2 + $0x28] sm:$0xff]
    %v298 = vld [vmem:[#allocation2 + $0x30] sm:$0xff]
    %v299 = vld [vmem:[#allocation2 + $0x38] sm:$0xff]
    %v300 = vld [vmem:[#allocation2 + $0x40] sm:$0xff]
    %v301 = vld [vmem:[#allocation2 + $0x48] sm:$0xff]
    %v302 = vld [vmem:[#allocation2 + $0x50] sm:$0xff]
    %v303 = vld [vmem:[#allocation2 + $0x58] sm:$0xff]
    %v304 = vld [vmem:[#allocation2 + $0x60] sm:$0xff]
    %v305 = vld [vmem:[#allocation2 + $0x68] sm:$0xff]
    %v306 = vld [vmem:[#allocation2 + $0x70] sm:$0xff]
    %v307 = vld [vmem:[#allocation2 + $0x78] sm:$0xff]
    %v308 = vld [vmem:[%s4] sm:$0xff]
    %v309 = vld [vmem:[%s4 + $0x8] sm:$0xff]
    %v310 = vld [vmem:[%s4 + $0x10] sm:$0xff]
    %v311 = vld [vmem:[%s4 + $0x18] sm:$0xff]
    %v312 = vld [vmem:[%s4 + $0x20] sm:$0xff]
    %v313 = vld [vmem:[%s4 + $0x28] sm:$0xff]
    %v314 = vld [vmem:[%s4 + $0x30] sm:$0xff]
    %v315 = vld [vmem:[%s4 + $0x38] sm:$0xff]
    %vm316 = vcmask 523264
    %v318 = vsel %vm316, %v291, 0
    %320 = vmatprep.subr.mxu0 0.0
    %321 = vmatpush1.msra.mxu0 %v308
    %322 = vmatprep.subr.mxu0 0.0
    %323 = vmatpush1.msra.mxu0 %v309
    %324 = vmatprep.subr.mxu0 0.0
    %325 = vmatpush1.msra.mxu0 %v310
    %326 = vmatprep.subr.mxu0 0.0
    %327 = vmatpush1.msra.mxu0 %v311
    %328 = vmatprep.subr.mxu0 0.0
    %329 = vmatpush1.msra.mxu0 %v312
    %330 = vmatprep.subr.mxu0 0.0
    %331 = vmatpush1.msra.mxu0 %v313
    %332 = vmatprep.subr.mxu0 0.0
    %333 = vmatpush1.msra.mxu0 %v314
    %334 = vmatprep.subr.mxu0 0.0
    %335 = vmatpush1.msra.mxu0 %v315
    %336 = vmatprep.subr.mxu0 0.0
    %337 = vmatpush1.msra.mxu0 0.0
    %338 = vmatprep.subr.mxu0 0.0
    %339 = vmatpush1.msra.mxu0 0.0
    %340 = vmatprep.subr.mxu0 0.0
    %341 = vmatpush1.msra.mxu0 0.0
    %342 = vmatprep.subr.mxu0 0.0
    %343 = vmatpush1.msra.mxu0 0.0
    %344 = vmatprep.subr.mxu0 0.0
    %345 = vmatpush1.msra.mxu0 0.0
    %346 = vmatprep.subr.mxu0 0.0
    %347 = vmatpush1.msra.mxu0 0.0
    %348 = vmatprep.subr.mxu0 0.0
    %349 = vmatpush1.msra.mxu0 0.0
    %350 = vmatprep.subr.mxu0 0.0
    %351 = vmatpush1.msra.mxu0 0.0
    %352 = vmatprep.subr.mxu0 0.0
    %353 = vmatpush1.msra.mxu0 0.0
    %354 = vmatprep.subr.mxu0 0.0
    %355 = vmatpush1.msra.mxu0 0.0
    %356 = vmatprep.subr.mxu0 0.0
    %357 = vmatpush1.msra.mxu0 0.0
    %358 = vmatprep.subr.mxu0 0.0
    %359 = vmatpush1.msra.mxu0 0.0
    %360 = vmatprep.subr.mxu0 0.0
    %361 = vmatpush1.msra.mxu0 0.0
    %362 = vmatprep.subr.mxu0 0.0
    %363 = vmatpush1.msra.mxu0 0.0
    %364 = vmatprep.subr.mxu0 0.0
    %365 = vmatpush1.msra.mxu0 0.0
    %366 = vmatprep.subr.mxu0 0.0
    %367 = vmatpush1.msra.mxu0 0.0
    %368 = vmatprep.subr.mxu0 0.0
    %369 = vmatpush1.msra.mxu0 0.0
    %370 = vmatprep.subr.mxu0 0.0
    %371 = vmatpush1.msra.mxu0 0.0
    %372 = vmatprep.subr.mxu0 0.0
    %373 = vmatpush1.msra.mxu0 0.0
    %374 = vmatprep.subr.mxu0 0.0
    %375 = vmatpush1.msra.mxu0 0.0
    %376 = vmatprep.subr.mxu0 0.0
    %377 = vmatpush1.msra.mxu0 0.0
    %378 = vmatprep.subr.mxu0 0.0
    %379 = vmatpush1.msra.mxu0 0.0
    %380 = vmatprep.subr.mxu0 0.0
    %381 = vmatpush1.msra.mxu0 0.0
    %382 = vmatprep.subr.mxu0 0.0
    %383 = vmatpush1.msra.mxu0 0.0
    %384 = vmatprep.mubr.f32.mxu0 0.0
    %385 = vmatmul.mubr.f32.gmra.mrb[0].mxu0 %v318
    %v386 = vpop.f32.mrb[0].mxu0
    %v387 = vadd.f32 0.0, %v386
    %v388 = vpop.f32.mrb[0].mxu0
    %389 = vdwg.mxu0
    %v390 = vlaneseq
    %v391 = vshrl.u32 %v390, 7
    %v392 = vsub.s32 0, %v391
    %v393 = vrot.slane %v387, %v392
    %v394 = vadd.f32 %v292, %v393
    %v395 = vadd.f32 %v293, %v393
    %v396 = vadd.f32 %v294, %v393
    %v397 = vadd.f32 %v295, %v393
    %v398 = vadd.f32 %v296, %v393
    %v399 = vadd.f32 %v297, %v393
    %v400 = vadd.f32 %v298, %v393
    %v401 = vadd.f32 %v299, %v393
    %v402 = vadd.f32 %v300, %v393
    %v403 = vadd.f32 %v301, %v393
    %v404 = vadd.f32 %v302, %v393
    %v405 = vadd.f32 %v303, %v393
    %v406 = vadd.f32 %v304, %v393
    %v407 = vadd.f32 %v305, %v393
    %v408 = vadd.f32 %v306, %v393
    %v409 = vadd.f32 %v307, %v393
    %v410 = vtanh.pop %v394
    %v411 = vtanh.pop %v395
    %v412 = vtanh.pop %v396
    %v413 = vtanh.pop %v397
    %v414 = vtanh.pop %v398
    %v415 = vtanh.pop %v399
    %v416 = vtanh.pop %v400
    %v417 = vtanh.pop %v401
    %v418 = vtanh.pop %v402
    %v419 = vtanh.pop %v403
    %v420 = vtanh.pop %v404
    %v421 = vtanh.pop %v405
    %v422 = vtanh.pop %v406
    %v423 = vtanh.pop %v407
    %v424 = vtanh.pop %v408
    %v425 = vtanh.pop %v409
    %v426 = vld [vmem:[%s4 + $0x60] sm:$0x1]
    %v428 = vsel %vm290, %v426, 0
    %v431 = vsel %vm290, %v410, 0
    %v434 = vsel %vm290, %v411, 0
    %v437 = vsel %vm290, %v412, 0
    %v440 = vsel %vm290, %v413, 0
    %v443 = vsel %vm290, %v414, 0
    %v446 = vsel %vm290, %v415, 0
    %v449 = vsel %vm290, %v416, 0
    %v452 = vsel %vm290, %v417, 0
    %v455 = vsel %vm290, %v418, 0
    %v458 = vsel %vm290, %v419, 0
    %v461 = vsel %vm290, %v420, 0
    %v464 = vsel %vm290, %v421, 0
    %v467 = vsel %vm290, %v422, 0
    %v470 = vsel %vm290, %v423, 0
    %v473 = vsel %vm290, %v424, 0
    %v476 = vsel %vm290, %v425, 0
    %478 = vmatprep.subr.mxu0 0.0
    %479 = vmatpush1.xpose.msra.mxu0 %v431
    %480 = vmatprep.subr.mxu0 0.0
    %481 = vmatpush1.xpose.msra.mxu0 %v434
    %482 = vmatprep.subr.mxu0 0.0
    %483 = vmatpush1.xpose.msra.mxu0 %v437
    %484 = vmatprep.subr.mxu0 0.0
    %485 = vmatpush1.xpose.msra.mxu0 %v440
    %486 = vmatprep.subr.mxu0 0.0
    %487 = vmatpush1.xpose.msra.mxu0 %v443
    %488 = vmatprep.subr.mxu0 0.0
    %489 = vmatpush1.xpose.msra.mxu0 %v446
    %490 = vmatprep.subr.mxu0 0.0
    %491 = vmatpush1.xpose.msra.mxu0 %v449
    %492 = vmatprep.subr.mxu0 0.0
    %493 = vmatpush1.xpose.msra.mxu0 %v452
    %494 = vmatprep.subr.mxu0 0.0
    %495 = vmatpush1.xpose.msra.mxu0 %v455
    %496 = vmatprep.subr.mxu0 0.0
    %497 = vmatpush1.xpose.msra.mxu0 %v458
    %498 = vmatprep.subr.mxu0 0.0
    %499 = vmatpush1.xpose.msra.mxu0 %v461
    %500 = vmatprep.subr.mxu0 0.0
    %501 = vmatpush1.xpose.msra.mxu0 %v464
    %502 = vmatprep.subr.mxu0 0.0
    %503 = vmatpush1.xpose.msra.mxu0 %v467
    %504 = vmatprep.subr.mxu0 0.0
    %505 = vmatpush1.xpose.msra.mxu0 %v470
    %506 = vmatprep.subr.mxu0 0.0
    %507 = vmatpush1.xpose.msra.mxu0 %v473
    %508 = vmatprep.subr.mxu0 0.0
    %509 = vmatpush1.xpose.msra.mxu0 %v476
    %510 = vmatprep.subr.mxu0 0.0
    %511 = vmatpush1.xpose.msra.mxu0 0.0
    %512 = vmatprep.subr.mxu0 0.0
    %513 = vmatpush1.xpose.msra.mxu0 0.0
    %514 = vmatprep.subr.mxu0 0.0
    %515 = vmatpush1.xpose.msra.mxu0 0.0
    %516 = vmatprep.subr.mxu0 0.0
    %517 = vmatpush1.xpose.msra.mxu0 0.0
    %518 = vmatprep.subr.mxu0 0.0
    %519 = vmatpush1.xpose.msra.mxu0 0.0
    %520 = vmatprep.subr.mxu0 0.0
    %521 = vmatpush1.xpose.msra.mxu0 0.0
    %522 = vmatprep.subr.mxu0 0.0
    %523 = vmatpush1.xpose.msra.mxu0 0.0
    %524 = vmatprep.subr.mxu0 0.0
    %525 = vmatpush1.xpose.msra.mxu0 0.0
    %526 = vmatprep.subr.mxu0 0.0
    %527 = vmatpush1.xpose.msra.mxu0 0.0
    %528 = vmatprep.subr.mxu0 0.0
    %529 = vmatpush1.xpose.msra.mxu0 0.0
    %530 = vmatprep.subr.mxu0 0.0
    %531 = vmatpush1.xpose.msra.mxu0 0.0
    %532 = vmatprep.subr.mxu0 0.0
    %533 = vmatpush1.xpose.msra.mxu0 0.0
    %534 = vmatprep.subr.mxu0 0.0
    %535 = vmatpush1.xpose.msra.mxu0 0.0
    %536 = vmatprep.subr.mxu0 0.0
    %537 = vmatpush1.xpose.msra.mxu0 0.0
    %538 = vmatprep.subr.mxu0 0.0
    %539 = vmatpush1.xpose.msra.mxu0 0.0
    %540 = vmatprep.subr.mxu0 0.0
    %541 = vmatpush1.xpose.msra.mxu0 0.0
    %542 = vmatprep.mubr.f32.mxu0 0.0
    %543 = vmatmul.mubr.f32.gmra.mrb[0].mxu0 %v428
    %v544 = vpop.f32.mrb[0].mxu0
    %v545 = vadd.f32 0.0, %v544
    %v546 = vpop.f32.mrb[0].mxu0
    %547 = vdwg.mxu0
    %v548 = vlaneseq
    %v549 = vand.u32 %v548, 127
    %vm550 = vcmp.lt.s32.totalorder %v549, 32
    %v551 = vsel %vm550, %v545, -1e+30
    %vm552 = vcmask 1040384
    %v553 = vsel %vm552, %v551, -inf
    %554 = vmax.xlane.f32.xlu0 %v553
    %v555 = vpop.xlane.xlu0 %554
    %v556 = vsub.f32 %v551, %v555
    %v557 = vmul.f32 %v556, 1.442695
    %v558 = vpow.pop %v557
    %v559 = vsel %vm552, %v558, 0.0
    %560 = vadd.xlane.f32.xlu0 %v559
    %v561 = vpop.xlane.xlu0 %560
    %v562 = vrcp.pop %v561
    %v563 = vmul.f32 %v558, %v562
    %v564 = vld [vmem:[%s3] sm:$0xff]
    %v565 = vld [vmem:[%s3 + $0x8] sm:$0xff]
    %v566 = vld [vmem:[%s3 + $0x10] sm:$0xff]
    %v567 = vld [vmem:[%s3 + $0x18] sm:$0xff]
    %v568 = vld [vmem:[%s3 + $0x20] sm:$0xff]
    %v569 = vld [vmem:[%s3 + $0x28] sm:$0xff]
    %v570 = vld [vmem:[%s3 + $0x30] sm:$0xff]
    %v571 = vld [vmem:[%s3 + $0x38] sm:$0xff]
    %v572 = vld [vmem:[%s3 + $0x40] sm:$0xff]
    %v573 = vld [vmem:[%s3 + $0x48] sm:$0xff]
    %v574 = vld [vmem:[%s3 + $0x50] sm:$0xff]
    %v575 = vld [vmem:[%s3 + $0x58] sm:$0xff]
    %v576 = vld [vmem:[%s3 + $0x60] sm:$0xff]
    %v577 = vld [vmem:[%s3 + $0x68] sm:$0xff]
    %v578 = vld [vmem:[%s3 + $0x70] sm:$0xff]
    %v579 = vld [vmem:[%s3 + $0x78] sm:$0xff]
    %580 = vmatprep.subr.mxu0 0.0
    %581 = vmatpush1.msra.mxu0 %v564
    %582 = vmatprep.subr.mxu0 0.0
    %583 = vmatpush1.msra.mxu0 %v565
    %584 = vmatprep.subr.mxu0 0.0
    %585 = vmatpush1.msra.mxu0 %v566
    %586 = vmatprep.subr.mxu0 0.0
    %587 = vmatpush1.msra.mxu0 %v567
    %588 = vmatprep.subr.mxu0 0.0
    %589 = vmatpush1.msra.mxu0 %v568
    %590 = vmatprep.subr.mxu0 0.0
    %591 = vmatpush1.msra.mxu0 %v569
    %592 = vmatprep.subr.mxu0 0.0
    %593 = vmatpush1.msra.mxu0 %v570
    %594 = vmatprep.subr.mxu0 0.0
    %595 = vmatpush1.msra.mxu0 %v571
    %596 = vmatprep.subr.mxu0 0.0
    %597 = vmatpush1.msra.mxu0 %v572
    %598 = vmatprep.subr.mxu0 0.0
    %599 = vmatpush1.msra.mxu0 %v573
    %600 = vmatprep.subr.mxu0 0.0
    %601 = vmatpush1.msra.mxu0 %v574
    %602 = vmatprep.subr.mxu0 0.0
    %603 = vmatpush1.msra.mxu0 %v575
    %604 = vmatprep.subr.mxu0 0.0
    %605 = vmatpush1.msra.mxu0 %v576
    %606 = vmatprep.subr.mxu0 0.0
    %607 = vmatpush1.msra.mxu0 %v577
    %608 = vmatprep.subr.mxu0 0.0
    %609 = vmatpush1.msra.mxu0 %v578
    %610 = vmatprep.subr.mxu0 0.0
    %611 = vmatpush1.msra.mxu0 %v579
    %612 = vmatprep.subr.mxu0 0.0
    %613 = vmatpush1.msra.mxu0 0.0
    %614 = vmatprep.subr.mxu0 0.0
    %615 = vmatpush1.msra.mxu0 0.0
    %616 = vmatprep.subr.mxu0 0.0
    %617 = vmatpush1.msra.mxu0 0.0
    %618 = vmatprep.subr.mxu0 0.0
    %619 = vmatpush1.msra.mxu0 0.0
    %620 = vmatprep.subr.mxu0 0.0
    %621 = vmatpush1.msra.mxu0 0.0
    %622 = vmatprep.subr.mxu0 0.0
    %623 = vmatpush1.msra.mxu0 0.0
    %624 = vmatprep.subr.mxu0 0.0
    %625 = vmatpush1.msra.mxu0 0.0
    %626 = vmatprep.subr.mxu0 0.0
    %627 = vmatpush1.msra.mxu0 0.0
    %628 = vmatprep.subr.mxu0 0.0
    %629 = vmatpush1.msra.mxu0 0.0
    %630 = vmatprep.subr.mxu0 0.0
    %631 = vmatpush1.msra.mxu0 0.0
    %632 = vmatprep.subr.mxu0 0.0
    %633 = vmatpush1.msra.mxu0 0.0
    %634 = vmatprep.subr.mxu0 0.0
    %635 = vmatpush1.msra.mxu0 0.0
    %636 = vmatprep.subr.mxu0 0.0
    %637 = vmatpush1.msra.mxu0 0.0
    %638 = vmatprep.subr.mxu0 0.0
    %639 = vmatpush1.msra.mxu0 0.0
    %640 = vmatprep.subr.mxu0 0.0
    %641 = vmatpush1.msra.mxu0 0.0
    %642 = vmatprep.subr.mxu0 0.0
    %643 = vmatpush1.msra.mxu0 0.0
    %644 = vmatprep.mubr.f32.mxu0 0.0
    %645 = vmatmul.mubr.f32.gmra.mrb[0].mxu0 %v563
    %v646 = vpop.f32.mrb[0].mxu0
    %v647 = vadd.f32 0.0, %v646
    %v648 = vpop.f32.mrb[0].mxu0
    %649 = vdwg.mxu0
    %651 = vrot.lane.b32.xlu0 %v647, 32
    %v652 = vpop.permute.xlu0 %651
    %655 = vrot.lane.b32.xlu0 %v283, 64
    %v656 = vpop.permute.xlu0 %655
    %v658 = vsel %vm290, %v282, %v652
    %v659 = vsel %vm316, %v658, %v656
    %v660 = vld [vmem:[%s5] sm:$0xff]
    %v661 = vld [vmem:[%s5 + $0x8] sm:$0xff]
    %v662 = vld [vmem:[%s5 + $0x10] sm:$0xff]
    %v663 = vld [vmem:[%s5 + $0x18] sm:$0xff]
    %v664 = vld [vmem:[%s5 + $0x20] sm:$0xff]
    %v665 = vld [vmem:[%s5 + $0x28] sm:$0xff]
    %v666 = vld [vmem:[%s5 + $0x30] sm:$0xff]
    %v667 = vld [vmem:[%s5 + $0x38] sm:$0xff]
    %v668 = vld [vmem:[%s5 + $0x40] sm:$0xff]
    %v669 = vld [vmem:[%s5 + $0x48] sm:$0xff]
    %v670 = vld [vmem:[%s5 + $0x50] sm:$0xff]
    %v671 = vld [vmem:[%s5 + $0x58] sm:$0xff]
    %v672 = vld [vmem:[%s5 + $0x60] sm:$0x1]
    %vm673 = vcmask 785408
    %v675 = vsel %vm673, %v659, 0
    %677 = vmatprep.subr.mxu0 0.0
    %678 = vmatpush1.msra.mxu0 %v660
    %679 = vmatprep.subr.mxu0 0.0
    %680 = vmatpush1.msra.mxu0 %v661
    %681 = vmatprep.subr.mxu0 0.0
    %682 = vmatpush1.msra.mxu0 %v662
    %683 = vmatprep.subr.mxu0 0.0
    %684 = vmatpush1.msra.mxu0 %v663
    %685 = vmatprep.subr.mxu0 0.0
    %686 = vmatpush1.msra.mxu0 %v664
    %687 = vmatprep.subr.mxu0 0.0
    %688 = vmatpush1.msra.mxu0 %v665
    %689 = vmatprep.subr.mxu0 0.0
    %690 = vmatpush1.msra.mxu0 %v666
    %691 = vmatprep.subr.mxu0 0.0
    %692 = vmatpush1.msra.mxu0 %v667
    %693 = vmatprep.subr.mxu0 0.0
    %694 = vmatpush1.msra.mxu0 %v668
    %695 = vmatprep.subr.mxu0 0.0
    %696 = vmatpush1.msra.mxu0 %v669
    %697 = vmatprep.subr.mxu0 0.0
    %698 = vmatpush1.msra.mxu0 %v670
    %699 = vmatprep.subr.mxu0 0.0
    %700 = vmatpush1.msra.mxu0 %v671
    %701 = vmatprep.subr.mxu0 0.0
    %702 = vmatpush1.msra.mxu0 0.0
    %703 = vmatprep.subr.mxu0 0.0
    %704 = vmatpush1.msra.mxu0 0.0
    %705 = vmatprep.subr.mxu0 0.0
    %706 = vmatpush1.msra.mxu0 0.0
    %707 = vmatprep.subr.mxu0 0.0
    %708 = vmatpush1.msra.mxu0 0.0
    %709 = vmatprep.subr.mxu0 0.0
    %710 = vmatpush1.msra.mxu0 0.0
    %711 = vmatprep.subr.mxu0 0.0
    %712 = vmatpush1.msra.mxu0 0.0
    %713 = vmatprep.subr.mxu0 0.0
    %714 = vmatpush1.msra.mxu0 0.0
    %715 = vmatprep.subr.mxu0 0.0
    %716 = vmatpush1.msra.mxu0 0.0
    %717 = vmatprep.subr.mxu0 0.0
    %718 = vmatpush1.msra.mxu0 0.0
    %719 = vmatprep.subr.mxu0 0.0
    %720 = vmatpush1.msra.mxu0 0.0
    %721 = vmatprep.subr.mxu0 0.0
    %722 = vmatpush1.msra.mxu0 0.0
    %723 = vmatprep.subr.mxu0 0.0
    %724 = vmatpush1.msra.mxu0 0.0
    %725 = vmatprep.subr.mxu0 0.0
    %726 = vmatpush1.msra.mxu0 0.0
    %727 = vmatprep.subr.mxu0 0.0
    %728 = vmatpush1.msra.mxu0 0.0
    %729 = vmatprep.subr.mxu0 0.0
    %730 = vmatpush1.msra.mxu0 0.0
    %731 = vmatprep.subr.mxu0 0.0
    %732 = vmatpush1.msra.mxu0 0.0
    %733 = vmatprep.subr.mxu0 0.0
    %734 = vmatpush1.msra.mxu0 0.0
    %735 = vmatprep.subr.mxu0 0.0
    %736 = vmatpush1.msra.mxu0 0.0
    %737 = vmatprep.subr.mxu0 0.0
    %738 = vmatpush1.msra.mxu0 0.0
    %739 = vmatprep.subr.mxu0 0.0
    %740 = vmatpush1.msra.mxu0 0.0
    %741 = vmatprep.mubr.f32.mxu0 0.0
    %742 = vmatmul.mubr.f32.gmra.mrb[0].mxu0 %v675
    %v743 = vpop.f32.mrb[0].mxu0
    %v744 = vadd.f32 %v672, %v743
    %v745 = vpop.f32.mrb[0].mxu0
    %746 = vdwg.mxu0
    %v747 = vxor.u32 %v744, 2147483648
    %v748 = vmul.f32 %v747, 1.442695
    %v749 = vpow.pop %v748
    %v750 = vadd.f32 %v749, 1.0
    %v751 = vrcp.pop %v750
    %v752 = vmul.f32 1.0, %v751
    %v753 = vtanh.pop %v744
    %755 = vrot.lane.b32.xlu0 %v284, 32
    %v756 = vpop.permute.xlu0 %755
    %v758 = vmul.f32 %v752, %v756
    %760 = vrot.lane.b32.xlu0 %v753, 64
    %v761 = vpop.permute.xlu0 %760
    %v763 = vmul.f32 %v752, %v761
    %765 = vrot.lane.b32.xlu0 %v763, 32
    %v766 = vpop.permute.xlu0 %765
    %v768 = vadd.f32 %v758, %v766
    %v769 = vtanh.pop %v768
    %771 = vrot.lane.b32.xlu0 %v769, 64
    %v772 = vpop.permute.xlu0 %771
    %v774 = vmul.f32 %v752, %v772
    %v775 = vadd.f32 %v285, %v563
    %v776 = vld [vmem:[%s4 + $0x68] sm:$0xf]
    %v777 = vmul.f32 %v647, %v776
    %v779 = vrot.slane %v776, 1
    %v781 = vmul.f32 %v283, %v779
    %v782 = vadd.f32 %v777, %v781
    %v784 = vunpack.c.l.s4 1966171168
    %v785 = vunpack.c.0.s8 %v784
    %v786 = vlaneseq
    %v787 = vshrl.u32 %v786, 7
    %v788 = vsub.s32 %v785, %v787
    %v789 = vrot.slane %v776, %v788
    %v791 = vunpack.c.l.s4 1966171168
    %v792 = vunpack.c.0.s8 %v791
    %v793 = vlaneseq
    %v794 = vshrl.u32 %v793, 7
    %v795 = vsub.s32 %v792, %v794
    %v796 = vrot.slane %v789, %v795
    %v797 = vcombine.high %v796, %v796
    %v799 = vmul.f32 %v282, %v797
    %v800 = vadd.f32 %v782, %v799
    %v801 = vrot.slane %v776, 3
    %v803 = vmul.f32 %v285, %v801
    %v804 = vadd.f32 %v800, %v803
    %vm805 = vcmask 253952
    %v806 = vsel %vm805, %v804, 0.0
    %807 = vadd.xlane.f32.xlu0 %v806
    %v808 = vpop.xlane.xlu0 %807
    %s809 = sld [smem:[#allocation6]]
    %v810 = vstv %s809
    %v811 = vadd.f32 %v808, %v810
    %v812 = vxor.u32 %v811, 2147483648
    %v813 = vmul.f32 %v812, 1.442695
    %v814 = vpow.pop %v813
    %v815 = vadd.f32 %v814, 1.0
    %v816 = vrcp.pop %v815
    %v817 = vmul.f32 1.0, %v816
    %818 = vst [vmem:[#allocation9] sm:$0x1] %v563
    %v820 = vrot.slane %v768, 7
    %821 = vrot.lane.b32.xlu0 %v820, 64
    %v822 = vpop.permute.xlu0 %821
    %v825 = vrot.slane %v775, 6
    %826 = vrot.lane.b32.xlu0 %v825, 96
    %v827 = vpop.permute.xlu0 %826
    %v829 = vsel %vm552, %v774, %v822
    %vm830 = vcmask 1041408
    %v831 = vsel %vm830, %v829, %v827
    %833 = vrot.lane.b32.xlu0 %v831, 32
    %v834 = vpop.permute.xlu0 %833
    %vm836 = vcmask 256000
    %837 = vst.msk [vmem:[#allocation3] sm:$0x7] %vm836, %v834
    %838 = vst.msk [vmem:[#allocation11] sm:$0x7] %vm836, %v834
    %vm839 = vcmp.lt.s32.totalorder %v549, 48
    %v840 = vsel %vm839, %v817, 0.0
    %v841 = vsub.f32 1.0, %v817
    %v842 = vmul.f32 %v841, %v563
    %v843 = vadd.f32 %v840, %v842
    %844 = vst [vmem:[#allocation7] sm:$0x1] %v843
    // Predicated region
    $region30: #{tpu_custom_call.1} parent=1 // pred_check
      _
    $region31: #{tpu_custom_call.1} parent=1 // pred_check_branch
      %846 = sbr.rel (0) target = $region33
    $region32: #{tpu_custom_call.1} parent=1 // pred_region
      %s848 = ssub.s32 16, 16
      %849 = vsyncadd [#allocation8], %s848
      %s851 = sshll.u32 [#allocation7], 4
      %s852 = int_to_ptr.vmem [resolvable:$true] %s851
      %854 = dma.vmem_to_hbm [thread:$0]  %s852, 16, %s7, [#allocation8]
    $region33: #{tpu_custom_call.1} parent=1 // pred_fallthru
      _
    // Predicated region
    $region34: #{tpu_custom_call.1} parent=1 // pred_check
      _
    $region35: #{tpu_custom_call.1} parent=1 // pred_check_branch
      %856 = sbr.rel (0) target = $region37
    $region36: #{tpu_custom_call.1} parent=1 // pred_region
      %s858 = ssub.s32 16, 16
      %859 = vsyncadd [#allocation10], %s858
      %s861 = sshll.u32 [#allocation9], 4
      %s862 = int_to_ptr.vmem [resolvable:$true] %s861
      %864 = dma.vmem_to_hbm [thread:$0]  %s862, 16, %s8, [#allocation10]
    $region37: #{tpu_custom_call.1} parent=1 // pred_fallthru
      _
    // Predicated region
    $region38: #{tpu_custom_call.1} parent=1 // pred_check
      _
    $region39: #{tpu_custom_call.1} parent=1 // pred_check_branch
      %866 = sbr.rel (0) target = $region41
    $region40: #{tpu_custom_call.1} parent=1 // pred_region
      %s868 = ssub.s32 64, 64
      %869 = vsyncadd [#allocation10], %s868
      %s871 = sshll.u32 [#allocation11], 4
      %s872 = int_to_ptr.vmem [resolvable:$true] %s871
      %874 = dma.vmem_to_hbm [thread:$0]  %s872, 64, %s9, [#allocation10]
    $region41: #{tpu_custom_call.1} parent=1 // pred_fallthru
      _
    // Predicated region
    $region42: #{tpu_custom_call.1} parent=1 // pred_check
      _
    $region43: #{tpu_custom_call.1} parent=1 // pred_check_branch
      %876 = sbr.rel (0) target = $region45
    $region44: #{tpu_custom_call.1} parent=1 // pred_region
      %877 = dma.done [#allocation8], 16
    $region45: #{tpu_custom_call.1} parent=1 // pred_fallthru
      _
    // Predicated region
    $region46: #{tpu_custom_call.1} parent=1 // pred_check
      _
    $region47: #{tpu_custom_call.1} parent=1 // pred_check_branch
      %879 = sbr.rel (0) target = $region49
    $region48: #{tpu_custom_call.1} parent=1 // pred_region
      %880 = dma.done [#allocation10], 16
    $region49: #{tpu_custom_call.1} parent=1 // pred_fallthru
      _
    // Predicated region
    $region50: #{tpu_custom_call.1} parent=1 // pred_check
      _
    $region51: #{tpu_custom_call.1} parent=1 // pred_check_branch
      %882 = sbr.rel (0) target = $region53
    $region52: #{tpu_custom_call.1} parent=1 // pred_region
      %883 = dma.done [#allocation10], 64
    $region53: #{tpu_custom_call.1} parent=1 // pred_fallthru
      _
    %884 = vsyncpa [#allocation8], 1
    %885 = vsyncpa [#allocation10], 1

</llo_original>
